<compile_context>
chip_gen: v6e
topology: v6e:2x2x1
jax: 0.10.0
libtpu: 0.0.40
codegen_flags: <defaults>
</compile_context>

<pallas_src>
import functools

import numpy as np
import jax
import jax.numpy as jnp
from jax.experimental import pallas as pl
from jax.experimental.pallas import tpu as pltpu

EPS = 1e-5   # nn.BatchNorm2d default eps
K = 3        # kernel_size=3 -> padding=1 ("SAME")


def double_conv_kernel(x_ref, w1s_ref, w2s_ref, g1_ref, be1_ref,
                       g2_ref, be2_ref, o_ref, *, C):
    N, H, WC = x_ref.shape              # packed, lane-dense: lane axis = W*C
    W = WC // C
    NH = N * H
    inv_cnt = 1.0 / (N * H * W)

    x3 = x_ref[...]                     # (N, H, W*C), unpadded
    x2 = x3.reshape(NH, WC)             # residual view (lane-aligned, full width)

    zrow = jnp.zeros((N, 1, WC), jnp.float32)

    def taps(v3):
        """(N, H, W*C) -> (N*H, 3*W*C): rows h-1 / h / h+1 stacked along the
        contraction axis.  Per-image H-halo handled by zero-row concat in
        registers (no VMEM scratch, no halo round trip)."""
        up = jnp.concatenate([zrow, v3[:, :H - 1, :]], axis=1)   # row h-1
        dn = jnp.concatenate([v3[:, 1:, :], zrow], axis=1)       # row h+1
        return jnp.concatenate([up, v3, dn], axis=2).reshape(NH, 3 * WC)

    def chan_bcast_sum(v):
        """(1, W*C) -> per-channel total replicated into every w block via a
        log2(W)-step XLU lane roll-and-add tree (replaces the M=1 pool/poolT
        MXU matmuls)."""
        s = v
        for k in range(W.bit_length() - 1):        # W is a power of two
            s = s + pltpu.roll(s, shift=C * (1 << k), axis=1)
        return s

    def bn(acc, g_f, be_f):
        """Training-mode BatchNorm with centered (two-pass) batch statistics,
        folded into one per-lane FMA.  g_f / be_f are pre-tiled to (1, W*C)."""
        mean_f = chan_bcast_sum(jnp.sum(acc, axis=0, keepdims=True)) * inv_cnt
        d = acc - mean_f
        var_f = chan_bcast_sum(jnp.sum(d * d, axis=0, keepdims=True)) * inv_cnt
        s_f = g_f * jax.lax.rsqrt(var_f + EPS)
        return d * s_f + be_f

    # conv1 (kx taps + SAME W-pad folded into banded weights, ky taps stacked on
    # the contraction axis -> a single MXU matmul) -> BN -> ReLU.
    acc1 = jnp.dot(taps(x3), w1s_ref[...], preferred_element_type=jnp.float32)
    y1 = jnp.maximum(bn(acc1, g1_ref[...], be1_ref[...]), 0.0)

    # conv2 -> BN -> + residual -> ReLU.  y1 never leaves vregs.
    acc2 = jnp.dot(taps(y1.reshape(N, H, WC)), w2s_ref[...],
                   preferred_element_type=jnp.float32)
    out = jnp.maximum(bn(acc2, g2_ref[...], be2_ref[...]) + x2, 0.0)

    o_ref[...] = out.reshape(N, H, WC).astype(o_ref.dtype)


def _stacked_band_weights(w_hwio, w_pixels):
    """Fold the kx taps + SAME W-padding of a KxK conv into one banded matrix per
    ky tap, stacked along the contraction axis:

      B[ky*W*Cin + win*Cin + ci, w*Cout + co] = w[ky, kx, ci, co],
      win = w + kx - (K-1)//2, taps falling outside [0, W) dropped (zero pad).
    """
    Kh, Kw, Cin, Cout = w_hwio.shape
    w_np = np.asarray(w_hwio, np.float32)
    B = np.zeros((Kh, w_pixels * Cin, w_pixels * Cout), np.float32)
    off = (Kw - 1) // 2
    for ky in range(Kh):
        for w in range(w_pixels):
            for kx in range(Kw):
                win = w + kx - off
                if 0 <= win < w_pixels:
                    B[ky, win * Cin:(win + 1) * Cin,
                      w * Cout:(w + 1) * Cout] = w_np[ky, kx]
    return jnp.asarray(B.reshape(Kh * w_pixels * Cin, w_pixels * Cout))


def double_conv_nhwc(x_nhwc, params):
    """x_nhwc: (N,H,W,Cin) float32; params: (w1,b1,g1,be1,w2,b2,g2,be2) with conv
    weights in HWIO layout.  Conv biases are accepted but unused by the kernel: a
    per-channel constant before training-mode BN cancels exactly."""
    w1, _b1, g1, be1, w2, _b2, g2, be2 = params
    N, H, W, Cin = x_nhwc.shape
    Cout = w1.shape[-1]
    assert Cin == Cout, "residual add requires in_channels == out_channels"
    assert W & (W - 1) == 0, "lane roll-tree BN assumes power-of-two W"
    WC = W * Cout

    # glue: pure reshape to the packed (N, H, W*Cin) lane-dense layout (no padding)
    xp = x_nhwc.astype(jnp.float32).reshape(N, H, W * Cin)

    w1s = _stacked_band_weights(w1, W)          # (3*W*Cin, W*Cout)
    w2s = _stacked_band_weights(w2, W)

    def tile_c(v):                              # (C,) -> (1, W*C) in packed layout
        return jnp.tile(jnp.asarray(v, jnp.float32).reshape(1, Cout), (1, W))

    vmem = pl.BlockSpec(memory_space=pltpu.MemorySpace.VMEM)
    flops = 2 * 2 * (N * H) * (3 * WC) * WC                    # two banded matmuls
    bytes_accessed = 4 * (xp.size + w1s.size + w2s.size + N * H * WC + 4 * WC)

    out_packed = pl.pallas_call(
        functools.partial(double_conv_kernel, C=Cout),
        out_shape=jax.ShapeDtypeStruct((N, H, WC), jnp.float32),
        in_specs=[vmem] * 7,
        out_specs=vmem,
        compiler_params=pltpu.CompilerParams(
            vmem_limit_bytes=32 * 1024 * 1024),
        cost_estimate=pl.CostEstimate(flops=flops, transcendentals=2 * WC,
                                      bytes_accessed=bytes_accessed),
    )(xp, w1s, w2s, tile_c(g1), tile_c(be1), tile_c(g2), tile_c(be2))
    return out_packed.reshape(N, H, W, Cout).astype(x_nhwc.dtype)


def ref_double_conv_nhwc(x, params):
    """Pure-JAX reference (matches PyTorch DoubleConv.forward in train mode),
    including the conv biases the kernel drops."""
    w1, b1, g1, be1, w2, b2, g2, be2 = params

    def conv(x, w, b):
        y = jax.lax.conv_general_dilated(
            x, w, window_strides=(1, 1), padding='SAME',
            dimension_numbers=('NHWC', 'HWIO', 'NHWC'))
        return y + b

    def bn(x, g, be):
        m = jnp.mean(x, axis=(0, 1, 2))
        v = jnp.mean((x - m) ** 2, axis=(0, 1, 2))
        return (x - m) * jax.lax.rsqrt(v + EPS) * g + be

    y = jax.nn.relu(bn(conv(x, w1, b1), g1, be1))
    y = bn(conv(y, w2, b2), g2, be2)
    return jax.nn.relu(y + x)


if __name__ == "__main__":
    key = jax.random.PRNGKey(0)
    N, C, H, W = 2, 8, 16, 16        # in_channels == out_channels == 8; W*C = 128 lanes
    ks = jax.random.split(key, 9)

    # PyTorch-style NCHW input
    x_nchw = jax.random.normal(ks[0], (N, C, H, W), jnp.float32)

    fan = C * K * K
    w1 = jax.random.normal(ks[1], (K, K, C, C), jnp.float32) / jnp.sqrt(fan)
    b1 = 0.1 * jax.random.normal(ks[2], (C,), jnp.float32)
    g1 = 1.0 + 0.1 * jax.random.normal(ks[3], (C,), jnp.float32)
    be1 = 0.1 * jax.random.normal(ks[4], (C,), jnp.float32)
    w2 = jax.random.normal(ks[5], (K, K, C, C), jnp.float32) / jnp.sqrt(fan)
    b2 = 0.1 * jax.random.normal(ks[6], (C,), jnp.float32)
    g2 = 1.0 + 0.1 * jax.random.normal(ks[7], (C,), jnp.float32)
    be2 = 0.1 * jax.random.normal(ks[8], (C,), jnp.float32)
    params = (w1, b1, g1, be1, w2, b2, g2, be2)

    x_nhwc = jnp.transpose(x_nchw, (0, 2, 3, 1))          # NCHW -> NHWC
    out_nhwc = jax.block_until_ready(double_conv_nhwc(x_nhwc, params))
    out_nchw = jnp.transpose(out_nhwc, (0, 3, 1, 2))      # back to PyTorch layout

    ref_nhwc = ref_double_conv_nhwc(x_nhwc, params)
    err = float(jnp.max(jnp.abs(out_nhwc - ref_nhwc)))
    assert jnp.allclose(out_nhwc, ref_nhwc, rtol=2e-4, atol=2e-4), err
    assert out_nchw.shape == (N, C, H, W)
    print("KERNEL_OK")
</pallas_src>

<mosaic_0001>
module attributes {stable_mosaic.version = 11 : i64} {
  func.func @double_conv_kernel(%arg0: memref<2x16x128xf32, #tpu.memory_space<vmem>>, %arg1: memref<384x128xf32, #tpu.memory_space<vmem>>, %arg2: memref<384x128xf32, #tpu.memory_space<vmem>>, %arg3: memref<1x128xf32, #tpu.memory_space<vmem>>, %arg4: memref<1x128xf32, #tpu.memory_space<vmem>>, %arg5: memref<1x128xf32, #tpu.memory_space<vmem>>, %arg6: memref<1x128xf32, #tpu.memory_space<vmem>>, %arg7: memref<2x16x128xf32, #tpu.memory_space<vmem>>) attributes {dimension_semantics = [], scalar_prefetch = 0 : i64, scratch_operands = 0 : i64, tpu.core_type = #tpu.core_type<tc>} {
    %c0 = arith.constant 0 : index
    %c0_0 = arith.constant 0 : index
    %c0_1 = arith.constant 0 : index
    %0 = vector.load %arg0[%c0, %c0_0, %c0_1] : memref<2x16x128xf32, #tpu.memory_space<vmem>>, vector<2x16x128xf32>
    %1 = vector.shape_cast %0 : vector<2x16x128xf32> to vector<32x128xf32>
    %cst = arith.constant 0.000000e+00 : f32
    %2 = vector.broadcast %cst : f32 to vector<2x1x128xf32>
    %3 = vector.extract_strided_slice %0 {offsets = [0, 0, 0], sizes = [2, 15, 128], strides = [1, 1, 1]} : vector<2x16x128xf32> to vector<2x15x128xf32>
    %4 = tpu.concatenate %2, %3 in 1 : vector<2x1x128xf32>, vector<2x15x128xf32> -> vector<2x16x128xf32>
    %5 = vector.extract_strided_slice %0 {offsets = [0, 1, 0], sizes = [2, 15, 128], strides = [1, 1, 1]} : vector<2x16x128xf32> to vector<2x15x128xf32>
    %6 = tpu.concatenate %5, %2 in 1 : vector<2x15x128xf32>, vector<2x1x128xf32> -> vector<2x16x128xf32>
    %7 = tpu.concatenate %4, %0, %6 in 2 : vector<2x16x128xf32>, vector<2x16x128xf32>, vector<2x16x128xf32> -> vector<2x16x384xf32>
    %8 = vector.shape_cast %7 : vector<2x16x384xf32> to vector<32x384xf32>
    %c0_2 = arith.constant 0 : index
    %c0_3 = arith.constant 0 : index
    %9 = vector.load %arg1[%c0_2, %c0_3] : memref<384x128xf32, #tpu.memory_space<vmem>>, vector<384x128xf32>
    %cst_4 = arith.constant dense<0.000000e+00> : vector<32x128xf32>
    %10 = tpu.matmul %8, %9, %cst_4 {dimension_numbers = #tpu.dot_dimension_numbers<[1], [0], [0], [1], [0, 0, 1, 1], [], []>} : vector<32x384xf32>, vector<384x128xf32>, vector<32x128xf32> -> vector<32x128xf32>
    %c0_5 = arith.constant 0 : index
    %c0_6 = arith.constant 0 : index
    %11 = vector.load %arg3[%c0_5, %c0_6] : memref<1x128xf32, #tpu.memory_space<vmem>>, vector<1x128xf32>
    %c0_7 = arith.constant 0 : index
    %c0_8 = arith.constant 0 : index
    %12 = vector.load %arg4[%c0_7, %c0_8] : memref<1x128xf32, #tpu.memory_space<vmem>>, vector<1x128xf32>
    %cst_9 = arith.constant dense<0.000000e+00> : vector<128xf32>
    %13 = vector.multi_reduction <add>, %10, %cst_9 [0] : vector<32x128xf32> to vector<128xf32>
    %14 = vector.shape_cast %13 : vector<128xf32> to vector<1x128xf32>
    %c8_i32 = arith.constant 8 : i32
    %15 = tpu.dynamic_rotate %14 by %c8_i32 dim 1 : vector<1x128xf32>, i32 -> vector<1x128xf32>
    %16 = arith.addf %14, %15 : vector<1x128xf32>
    %c16_i32 = arith.constant 16 : i32
    %17 = tpu.dynamic_rotate %16 by %c16_i32 dim 1 : vector<1x128xf32>, i32 -> vector<1x128xf32>
    %18 = arith.addf %16, %17 : vector<1x128xf32>
    %c32_i32 = arith.constant 32 : i32
    %19 = tpu.dynamic_rotate %18 by %c32_i32 dim 1 : vector<1x128xf32>, i32 -> vector<1x128xf32>
    %20 = arith.addf %18, %19 : vector<1x128xf32>
    %c64_i32 = arith.constant 64 : i32
    %21 = tpu.dynamic_rotate %20 by %c64_i32 dim 1 : vector<1x128xf32>, i32 -> vector<1x128xf32>
    %22 = arith.addf %20, %21 : vector<1x128xf32>
    %cst_10 = arith.constant 0.001953125 : f32
    %23 = vector.broadcast %cst_10 : f32 to vector<1x128xf32>
    %24 = arith.mulf %22, %23 : vector<1x128xf32>
    %25 = vector.broadcast %24 : vector<1x128xf32> to vector<32x128xf32>
    %26 = arith.subf %10, %25 : vector<32x128xf32>
    %27 = arith.mulf %26, %26 : vector<32x128xf32>
    %cst_11 = arith.constant dense<0.000000e+00> : vector<128xf32>
    %28 = vector.multi_reduction <add>, %27, %cst_11 [0] : vector<32x128xf32> to vector<128xf32>
    %29 = vector.shape_cast %28 : vector<128xf32> to vector<1x128xf32>
    %c8_i32_12 = arith.constant 8 : i32
    %30 = tpu.dynamic_rotate %29 by %c8_i32_12 dim 1 : vector<1x128xf32>, i32 -> vector<1x128xf32>
    %31 = arith.addf %29, %30 : vector<1x128xf32>
    %c16_i32_13 = arith.constant 16 : i32
    %32 = tpu.dynamic_rotate %31 by %c16_i32_13 dim 1 : vector<1x128xf32>, i32 -> vector<1x128xf32>
    %33 = arith.addf %31, %32 : vector<1x128xf32>
    %c32_i32_14 = arith.constant 32 : i32
    %34 = tpu.dynamic_rotate %33 by %c32_i32_14 dim 1 : vector<1x128xf32>, i32 -> vector<1x128xf32>
    %35 = arith.addf %33, %34 : vector<1x128xf32>
    %c64_i32_15 = arith.constant 64 : i32
    %36 = tpu.dynamic_rotate %35 by %c64_i32_15 dim 1 : vector<1x128xf32>, i32 -> vector<1x128xf32>
    %37 = arith.addf %35, %36 : vector<1x128xf32>
    %cst_16 = arith.constant 0.001953125 : f32
    %38 = vector.broadcast %cst_16 : f32 to vector<1x128xf32>
    %39 = arith.mulf %37, %38 : vector<1x128xf32>
    %cst_17 = arith.constant 9.99999974E-6 : f32
    %40 = vector.broadcast %cst_17 : f32 to vector<1x128xf32>
    %41 = arith.addf %39, %40 : vector<1x128xf32>
    %42 = math.rsqrt %41 : vector<1x128xf32>
    %43 = arith.mulf %11, %42 : vector<1x128xf32>
    %44 = vector.broadcast %43 : vector<1x128xf32> to vector<32x128xf32>
    %45 = arith.mulf %26, %44 : vector<32x128xf32>
    %46 = vector.broadcast %12 : vector<1x128xf32> to vector<32x128xf32>
    %47 = arith.addf %45, %46 : vector<32x128xf32>
    %cst_18 = arith.constant 0.000000e+00 : f32
    %48 = vector.broadcast %cst_18 : f32 to vector<32x128xf32>
    %49 = arith.maximumf %47, %48 : vector<32x128xf32>
    %50 = vector.shape_cast %49 : vector<32x128xf32> to vector<2x16x128xf32>
    %51 = vector.extract_strided_slice %50 {offsets = [0, 0, 0], sizes = [2, 15, 128], strides = [1, 1, 1]} : vector<2x16x128xf32> to vector<2x15x128xf32>
    %52 = tpu.concatenate %2, %51 in 1 : vector<2x1x128xf32>, vector<2x15x128xf32> -> vector<2x16x128xf32>
    %53 = vector.extract_strided_slice %50 {offsets = [0, 1, 0], sizes = [2, 15, 128], strides = [1, 1, 1]} : vector<2x16x128xf32> to vector<2x15x128xf32>
    %54 = tpu.concatenate %53, %2 in 1 : vector<2x15x128xf32>, vector<2x1x128xf32> -> vector<2x16x128xf32>
    %55 = tpu.concatenate %52, %50, %54 in 2 : vector<2x16x128xf32>, vector<2x16x128xf32>, vector<2x16x128xf32> -> vector<2x16x384xf32>
    %56 = vector.shape_cast %55 : vector<2x16x384xf32> to vector<32x384xf32>
    %c0_19 = arith.constant 0 : index
    %c0_20 = arith.constant 0 : index
    %57 = vector.load %arg2[%c0_19, %c0_20] : memref<384x128xf32, #tpu.memory_space<vmem>>, vector<384x128xf32>
    %cst_21 = arith.constant dense<0.000000e+00> : vector<32x128xf32>
    %58 = tpu.matmul %56, %57, %cst_21 {dimension_numbers = #tpu.dot_dimension_numbers<[1], [0], [0], [1], [0, 0, 1, 1], [], []>} : vector<32x384xf32>, vector<384x128xf32>, vector<32x128xf32> -> vector<32x128xf32>
    %c0_22 = arith.constant 0 : index
    %c0_23 = arith.constant 0 : index
    %59 = vector.load %arg5[%c0_22, %c0_23] : memref<1x128xf32, #tpu.memory_space<vmem>>, vector<1x128xf32>
    %c0_24 = arith.constant 0 : index
    %c0_25 = arith.constant 0 : index
    %60 = vector.load %arg6[%c0_24, %c0_25] : memref<1x128xf32, #tpu.memory_space<vmem>>, vector<1x128xf32>
    %cst_26 = arith.constant dense<0.000000e+00> : vector<128xf32>
    %61 = vector.multi_reduction <add>, %58, %cst_26 [0] : vector<32x128xf32> to vector<128xf32>
    %62 = vector.shape_cast %61 : vector<128xf32> to vector<1x128xf32>
    %c8_i32_27 = arith.constant 8 : i32
    %63 = tpu.dynamic_rotate %62 by %c8_i32_27 dim 1 : vector<1x128xf32>, i32 -> vector<1x128xf32>
    %64 = arith.addf %62, %63 : vector<1x128xf32>
    %c16_i32_28 = arith.constant 16 : i32
    %65 = tpu.dynamic_rotate %64 by %c16_i32_28 dim 1 : vector<1x128xf32>, i32 -> vector<1x128xf32>
    %66 = arith.addf %64, %65 : vector<1x128xf32>
    %c32_i32_29 = arith.constant 32 : i32
    %67 = tpu.dynamic_rotate %66 by %c32_i32_29 dim 1 : vector<1x128xf32>, i32 -> vector<1x128xf32>
    %68 = arith.addf %66, %67 : vector<1x128xf32>
    %c64_i32_30 = arith.constant 64 : i32
    %69 = tpu.dynamic_rotate %68 by %c64_i32_30 dim 1 : vector<1x128xf32>, i32 -> vector<1x128xf32>
    %70 = arith.addf %68, %69 : vector<1x128xf32>
    %cst_31 = arith.constant 0.001953125 : f32
    %71 = vector.broadcast %cst_31 : f32 to vector<1x128xf32>
    %72 = arith.mulf %70, %71 : vector<1x128xf32>
    %73 = vector.broadcast %72 : vector<1x128xf32> to vector<32x128xf32>
    %74 = arith.subf %58, %73 : vector<32x128xf32>
    %75 = arith.mulf %74, %74 : vector<32x128xf32>
    %cst_32 = arith.constant dense<0.000000e+00> : vector<128xf32>
    %76 = vector.multi_reduction <add>, %75, %cst_32 [0] : vector<32x128xf32> to vector<128xf32>
    %77 = vector.shape_cast %76 : vector<128xf32> to vector<1x128xf32>
    %c8_i32_33 = arith.constant 8 : i32
    %78 = tpu.dynamic_rotate %77 by %c8_i32_33 dim 1 : vector<1x128xf32>, i32 -> vector<1x128xf32>
    %79 = arith.addf %77, %78 : vector<1x128xf32>
    %c16_i32_34 = arith.constant 16 : i32
    %80 = tpu.dynamic_rotate %79 by %c16_i32_34 dim 1 : vector<1x128xf32>, i32 -> vector<1x128xf32>
    %81 = arith.addf %79, %80 : vector<1x128xf32>
    %c32_i32_35 = arith.constant 32 : i32
    %82 = tpu.dynamic_rotate %81 by %c32_i32_35 dim 1 : vector<1x128xf32>, i32 -> vector<1x128xf32>
    %83 = arith.addf %81, %82 : vector<1x128xf32>
    %c64_i32_36 = arith.constant 64 : i32
    %84 = tpu.dynamic_rotate %83 by %c64_i32_36 dim 1 : vector<1x128xf32>, i32 -> vector<1x128xf32>
    %85 = arith.addf %83, %84 : vector<1x128xf32>
    %cst_37 = arith.constant 0.001953125 : f32
    %86 = vector.broadcast %cst_37 : f32 to vector<1x128xf32>
    %87 = arith.mulf %85, %86 : vector<1x128xf32>
    %cst_38 = arith.constant 9.99999974E-6 : f32
    %88 = vector.broadcast %cst_38 : f32 to vector<1x128xf32>
    %89 = arith.addf %87, %88 : vector<1x128xf32>
    %90 = math.rsqrt %89 : vector<1x128xf32>
    %91 = arith.mulf %59, %90 : vector<1x128xf32>
    %92 = vector.broadcast %91 : vector<1x128xf32> to vector<32x128xf32>
    %93 = arith.mulf %74, %92 : vector<32x128xf32>
    %94 = vector.broadcast %60 : vector<1x128xf32> to vector<32x128xf32>
    %95 = arith.addf %93, %94 : vector<32x128xf32>
    %96 = arith.addf %95, %1 : vector<32x128xf32>
    %cst_39 = arith.constant 0.000000e+00 : f32
    %97 = vector.broadcast %cst_39 : f32 to vector<32x128xf32>
    %98 = arith.maximumf %96, %97 : vector<32x128xf32>
    %99 = vector.shape_cast %98 : vector<32x128xf32> to vector<2x16x128xf32>
    %c0_40 = arith.constant 0 : index
    %c0_41 = arith.constant 0 : index
    %c0_42 = arith.constant 0 : index
    %100 = vector.load %arg7[%c0_40, %c0_41, %c0_42] : memref<2x16x128xf32, #tpu.memory_space<vmem>>, vector<2x16x128xf32>
    tpu.vector_store %arg7[%c0_40, %c0_41, %c0_42], %99 {strides = array<i32>} : memref<2x16x128xf32, #tpu.memory_space<vmem>>, vector<2x16x128xf32>,
    return
  }
}

</mosaic_0001>

<llo_original>
// kernel: tpu_custom_call.1
$region0: #{tpu_custom_call.1}
  #allocation0 [shape = 'u32[]', space=smem, size = 0x4, offset = 0x4, fixed_abs, tag = 'smem constant byte address 0x4 - core index']
  #allocation1 [shape = 'u32[144,128]{1,0:T(1,128)}', space=vmem, size = 0x12000, scoped, tag = 'internal scratch']
  %s0 = inlined_call_operand.hbm [shape: f32[2,16,128], index: 0, kind: input, shape index: {}]
  %s1 = inlined_call_operand.hbm [shape: f32[384,128], index: 1, kind: input, shape index: {}]
  %s2 = inlined_call_operand.hbm [shape: f32[384,128], index: 2, kind: input, shape index: {}]
  %s3 = inlined_call_operand.vmem [shape: f32[1,128], index: 3, kind: input, shape index: {}]
  %s4 = inlined_call_operand.vmem [shape: f32[1,128], index: 4, kind: input, shape index: {}]
  %s5 = inlined_call_operand.vmem [shape: f32[1,128], index: 5, kind: input, shape index: {}]
  %s6 = inlined_call_operand.vmem [shape: f32[1,128], index: 6, kind: input, shape index: {}]
  %s7 = inlined_call_operand.hbm [shape: f32[2,16,128], index: 7, kind: output, shape index: {}]
  %s8 = sld [smem:[#allocation0]]
  $region50: #{tpu_custom_call.1} parent=0
    _
  %s10 = ssub.s32 1, %s8
  %s11 = scalar_select 0, %s10, %s8
  $region1: #{tpu_custom_call.1} parent=0
    #allocation2 [shape = 'u8[16384]{0}', space=vmem, size = 0x4000, scoped, tag = 'input window, operand 0, single buffered']
    #allocation3 [shape = 's32[1]{0}', space=sflag, size = 0x4, scoped, tag = 'scoped memory for tpu_custom_call.1']
    #allocation4 [shape = 's32[1]{0}', space=sflag, size = 0x4, scoped, tag = 'scoped memory for tpu_custom_call.1']
    #allocation5 [shape = 'u8[196608]{0}', space=vmem, size = 0x30000, scoped, tag = 'input window, operand 1, single buffered']
    #allocation6 [shape = 's32[1]{0}', space=sflag, size = 0x4, scoped, tag = 'scoped memory for tpu_custom_call.1']
    #allocation7 [shape = 'u8[196608]{0}', space=vmem, size = 0x30000, scoped, tag = 'input window, operand 2, single buffered']
    #allocation8 [shape = 'u8[16384]{0}', space=vmem, size = 0x4000, scoped, tag = 'output window, operand 0, single buffered']
    %12 = vsyncpa [#allocation3], 0
    %13 = vsyncpa [#allocation6], 0
    %14 = vsyncpa [#allocation4], 0
    // Predicated region
    $region2: #{tpu_custom_call.1} parent=1 // pred_check
      _
    $region3: #{tpu_custom_call.1} parent=1 // pred_check_branch
      %16 = sbr.rel (0) target = $region5
    $region4: #{tpu_custom_call.1} parent=1 // pred_region
      %s18 = ssub.s32 512, 512
      %19 = vsyncadd [#allocation3], %s18
      %s20 = sshll.u32 [#allocation2], 4
      %s21 = int_to_ptr.vmem [resolvable:$true] %s20
      %26 = dma.hbm_to_vmem [thread:$0]  %s0, 512, %s21, [#allocation3], 128, 128, 8
    $region5: #{tpu_custom_call.1} parent=1 // pred_fallthru
      _
    // Predicated region
    $region6: #{tpu_custom_call.1} parent=1 // pred_check
      _
    $region7: #{tpu_custom_call.1} parent=1 // pred_check_branch
      %28 = sbr.rel (0) target = $region9
    $region8: #{tpu_custom_call.1} parent=1 // pred_region
      %s30 = ssub.s32 6144, 6144
      %31 = vsyncadd [#allocation6], %s30
      %s32 = sshll.u32 [#allocation5], 4
      %s33 = int_to_ptr.vmem [resolvable:$true] %s32
      %38 = dma.hbm_to_vmem [thread:$0]  %s1, 6144, %s33, [#allocation6], 128, 128, 8
    $region9: #{tpu_custom_call.1} parent=1 // pred_fallthru
      _
    // Predicated region
    $region10: #{tpu_custom_call.1} parent=1 // pred_check
      _
    $region11: #{tpu_custom_call.1} parent=1 // pred_check_branch
      %40 = sbr.rel (0) target = $region13
    $region12: #{tpu_custom_call.1} parent=1 // pred_region
      %s42 = ssub.s32 6144, 6144
      %43 = vsyncadd [#allocation6], %s42
      %s44 = sshll.u32 [#allocation7], 4
      %s45 = int_to_ptr.vmem [resolvable:$true] %s44
      %50 = dma.hbm_to_vmem [thread:$0]  %s2, 6144, %s45, [#allocation6], 128, 128, 8
    $region13: #{tpu_custom_call.1} parent=1 // pred_fallthru
      _
    // Predicated region
    $region14: #{tpu_custom_call.1} parent=1 // pred_check
      _
    $region15: #{tpu_custom_call.1} parent=1 // pred_check_branch
      %52 = sbr.rel (0) target = $region17
    $region16: #{tpu_custom_call.1} parent=1 // pred_region
      _
    $region17: #{tpu_custom_call.1} parent=1 // pred_fallthru
      _
    // Predicated region
    $region18: #{tpu_custom_call.1} parent=1 // pred_check
      _
    $region19: #{tpu_custom_call.1} parent=1 // pred_check_branch
      %54 = sbr.rel (0) target = $region21
    $region20: #{tpu_custom_call.1} parent=1 // pred_region
      _
    $region21: #{tpu_custom_call.1} parent=1 // pred_fallthru
      _
    // Predicated region
    $region22: #{tpu_custom_call.1} parent=1 // pred_check
      _
    $region23: #{tpu_custom_call.1} parent=1 // pred_check_branch
      %56 = sbr.rel (0) target = $region25
    $region24: #{tpu_custom_call.1} parent=1 // pred_region
      _
    $region25: #{tpu_custom_call.1} parent=1 // pred_fallthru
      _
    // Predicated region
    $region26: #{tpu_custom_call.1} parent=1 // pred_check
      _
    $region27: #{tpu_custom_call.1} parent=1 // pred_check_branch
      %58 = sbr.rel (0) target = $region29
    $region28: #{tpu_custom_call.1} parent=1 // pred_region
      _
    $region29: #{tpu_custom_call.1} parent=1 // pred_fallthru
      _
    // Predicated region
    $region30: #{tpu_custom_call.1} parent=1 // pred_check
      _
    $region31: #{tpu_custom_call.1} parent=1 // pred_check_branch
      %60 = sbr.rel (0) target = $region33
    $region32: #{tpu_custom_call.1} parent=1 // pred_region
      %61 = dma.done [#allocation3], 512
    $region33: #{tpu_custom_call.1} parent=1 // pred_fallthru
      _
    // Predicated region
    $region34: #{tpu_custom_call.1} parent=1 // pred_check
      _
    $region35: #{tpu_custom_call.1} parent=1 // pred_check_branch
      %63 = sbr.rel (0) target = $region37
    $region36: #{tpu_custom_call.1} parent=1 // pred_region
      %64 = dma.done [#allocation6], 6144
    $region37: #{tpu_custom_call.1} parent=1 // pred_fallthru
      _
    // Predicated region
    $region38: #{tpu_custom_call.1} parent=1 // pred_check
      _
    $region39: #{tpu_custom_call.1} parent=1 // pred_check_branch
      %66 = sbr.rel (0) target = $region41
    $region40: #{tpu_custom_call.1} parent=1 // pred_region
      %67 = dma.done [#allocation6], 6144
    $region41: #{tpu_custom_call.1} parent=1 // pred_fallthru
      _
    %v68 = vld [vmem:[#allocation2] sm:$0xff]
    %v69 = vld [vmem:[#allocation2 + $0x8] sm:$0xff]
    %v70 = vld [vmem:[#allocation2 + $0x10] sm:$0xff]
    %v71 = vld [vmem:[#allocation2 + $0x18] sm:$0xff]
    %vm76 = vcmask 1040384
    %v77 = vrot.slane %v68, 7
    %v78 = vrot.slane %v69, 7
    %v79 = vsel %vm76, %v77, %v78
    %v80 = vrot.slane %v70, 7
    %v81 = vrot.slane %v71, 7
    %v82 = vsel %vm76, %v80, %v81
    %v87 = vsel %vm76, 0.0, %v77
    %v88 = vsel %vm76, 0.0, %v80
    %vm89 = vcmask 1046528
    %v90 = vrot.slane %v68, 1
    %v91 = vrot.slane %v69, 1
    %v92 = vsel %vm89, %v90, %v91
    %v93 = vrot.slane %v70, 1
    %v94 = vrot.slane %v71, 1
    %v95 = vsel %vm89, %v93, %v94
    %v100 = vsel %vm89, %v91, 0.0
    %v101 = vsel %vm89, %v94, 0.0
    %v102 = vld [vmem:[#allocation5] sm:$0xff]
    %v103 = vld [vmem:[#allocation5 + $0x8] sm:$0xff]
    %v104 = vld [vmem:[#allocation5 + $0x10] sm:$0xff]
    %v105 = vld [vmem:[#allocation5 + $0x18] sm:$0xff]
    %v106 = vld [vmem:[#allocation5 + $0x20] sm:$0xff]
    %v107 = vld [vmem:[#allocation5 + $0x28] sm:$0xff]
    %v108 = vld [vmem:[#allocation5 + $0x30] sm:$0xff]
    %v109 = vld [vmem:[#allocation5 + $0x38] sm:$0xff]
    %v110 = vld [vmem:[#allocation5 + $0x40] sm:$0xff]
    %v111 = vld [vmem:[#allocation5 + $0x48] sm:$0xff]
    %v112 = vld [vmem:[#allocation5 + $0x50] sm:$0xff]
    %v113 = vld [vmem:[#allocation5 + $0x58] sm:$0xff]
    %v114 = vld [vmem:[#allocation5 + $0x60] sm:$0xff]
    %v115 = vld [vmem:[#allocation5 + $0x68] sm:$0xff]
    %v116 = vld [vmem:[#allocation5 + $0x70] sm:$0xff]
    %v117 = vld [vmem:[#allocation5 + $0x78] sm:$0xff]
    %v118 = vld [vmem:[#allocation5 + $0x80] sm:$0xff]
    %v119 = vld [vmem:[#allocation5 + $0x88] sm:$0xff]
    %v120 = vld [vmem:[#allocation5 + $0x90] sm:$0xff]
    %v121 = vld [vmem:[#allocation5 + $0x98] sm:$0xff]
    %v122 = vld [vmem:[#allocation5 + $0xa0] sm:$0xff]
    %v123 = vld [vmem:[#allocation5 + $0xa8] sm:$0xff]
    %v124 = vld [vmem:[#allocation5 + $0xb0] sm:$0xff]
    %v125 = vld [vmem:[#allocation5 + $0xb8] sm:$0xff]
    %v126 = vld [vmem:[#allocation5 + $0xc0] sm:$0xff]
    %v127 = vld [vmem:[#allocation5 + $0xc8] sm:$0xff]
    %v128 = vld [vmem:[#allocation5 + $0xd0] sm:$0xff]
    %v129 = vld [vmem:[#allocation5 + $0xd8] sm:$0xff]
    %v130 = vld [vmem:[#allocation5 + $0xe0] sm:$0xff]
    %v131 = vld [vmem:[#allocation5 + $0xe8] sm:$0xff]
    %v132 = vld [vmem:[#allocation5 + $0xf0] sm:$0xff]
    %v133 = vld [vmem:[#allocation5 + $0xf8] sm:$0xff]
    %v134 = vld [vmem:[#allocation5 + $0x100] sm:$0xff]
    %v135 = vld [vmem:[#allocation5 + $0x108] sm:$0xff]
    %v136 = vld [vmem:[#allocation5 + $0x110] sm:$0xff]
    %v137 = vld [vmem:[#allocation5 + $0x118] sm:$0xff]
    %v138 = vld [vmem:[#allocation5 + $0x120] sm:$0xff]
    %v139 = vld [vmem:[#allocation5 + $0x128] sm:$0xff]
    %v140 = vld [vmem:[#allocation5 + $0x130] sm:$0xff]
    %v141 = vld [vmem:[#allocation5 + $0x138] sm:$0xff]
    %v142 = vld [vmem:[#allocation5 + $0x140] sm:$0xff]
    %v143 = vld [vmem:[#allocation5 + $0x148] sm:$0xff]
    %v144 = vld [vmem:[#allocation5 + $0x150] sm:$0xff]
    %v145 = vld [vmem:[#allocation5 + $0x158] sm:$0xff]
    %v146 = vld [vmem:[#allocation5 + $0x160] sm:$0xff]
    %v147 = vld [vmem:[#allocation5 + $0x168] sm:$0xff]
    %v148 = vld [vmem:[#allocation5 + $0x170] sm:$0xff]
    %v149 = vld [vmem:[#allocation5 + $0x178] sm:$0xff]
    %150 = vmatprep.subr.mxu0 0.0
    %151 = vmatpush1.msra.mxu0 %v117
    %152 = vmatprep.subr.mxu0 0.0
    %153 = vmatpush1.msra.mxu0 %v116
    %154 = vmatprep.subr.mxu0 0.0
    %155 = vmatpush1.msra.mxu0 %v115
    %156 = vmatprep.subr.mxu0 0.0
    %157 = vmatpush1.msra.mxu0 %v114
    %158 = vmatprep.subr.mxu0 0.0
    %159 = vmatpush1.msra.mxu0 %v113
    %160 = vmatprep.subr.mxu0 0.0
    %161 = vmatpush1.msra.mxu0 %v112
    %162 = vmatprep.subr.mxu0 0.0
    %163 = vmatpush1.msra.mxu0 %v111
    %164 = vmatprep.subr.mxu0 0.0
    %165 = vmatpush1.msra.mxu0 %v110
    %166 = vmatprep.subr.mxu0 0.0
    %167 = vmatpush1.msra.mxu0 %v109
    %168 = vmatprep.subr.mxu0 0.0
    %169 = vmatpush1.msra.mxu0 %v108
    %170 = vmatprep.subr.mxu0 0.0
    %171 = vmatpush1.msra.mxu0 %v107
    %172 = vmatprep.subr.mxu0 0.0
    %173 = vmatpush1.msra.mxu0 %v106
    %174 = vmatprep.subr.mxu0 0.0
    %175 = vmatpush1.msra.mxu0 %v105
    %176 = vmatprep.subr.mxu0 0.0
    %177 = vmatpush1.msra.mxu0 %v104
    %178 = vmatprep.subr.mxu0 0.0
    %179 = vmatpush1.msra.mxu0 %v103
    %180 = vmatprep.subr.mxu0 0.0
    %181 = vmatpush1.msra.mxu0 %v102
    %182 = vmatprep.subr.mxu0 0.0
    %183 = vmatpush2.msra.mxu0 %v133
    %184 = vmatprep.subr.mxu0 0.0
    %185 = vmatpush2.msra.mxu0 %v132
    %186 = vmatprep.subr.mxu0 0.0
    %187 = vmatpush2.msra.mxu0 %v131
    %188 = vmatprep.subr.mxu0 0.0
    %189 = vmatpush2.msra.mxu0 %v130
    %190 = vmatprep.subr.mxu0 0.0
    %191 = vmatpush2.msra.mxu0 %v129
    %192 = vmatprep.subr.mxu0 0.0
    %193 = vmatpush2.msra.mxu0 %v128
    %194 = vmatprep.subr.mxu0 0.0
    %195 = vmatpush2.msra.mxu0 %v127
    %196 = vmatprep.subr.mxu0 0.0
    %197 = vmatpush2.msra.mxu0 %v126
    %198 = vmatprep.subr.mxu0 0.0
    %199 = vmatpush2.msra.mxu0 %v125
    %200 = vmatprep.subr.mxu0 0.0
    %201 = vmatpush2.msra.mxu0 %v124
    %202 = vmatprep.subr.mxu0 0.0
    %203 = vmatpush2.msra.mxu0 %v123
    %204 = vmatprep.subr.mxu0 0.0
    %205 = vmatpush2.msra.mxu0 %v122
    %206 = vmatprep.subr.mxu0 0.0
    %207 = vmatpush2.msra.mxu0 %v121
    %208 = vmatprep.subr.mxu0 0.0
    %209 = vmatpush2.msra.mxu0 %v120
    %210 = vmatprep.subr.mxu0 0.0
    %211 = vmatpush2.msra.mxu0 %v119
    %212 = vmatprep.subr.mxu0 0.0
    %213 = vmatpush2.msra.mxu0 %v118
    %214 = vmatprep.mubr.f32.mxu0 %v68
    %215 = vmatmul.mubr.f32.gmra.mxu0 %v87
    %v216 = vpop.f32.mrf.mxu0
    %v217 = vadd.f32 0.0, %v216
    %v218 = vpop.f32.mrf.mxu0
    %219 = vmatprep.mubr.f32.mxu0 %v69
    %220 = vmatmul.mubr.f32.gmra.mxu0 %v79
    %v221 = vpop.f32.mrf.mxu0
    %v222 = vadd.f32 0.0, %v221
    %v223 = vpop.f32.mrf.mxu0
    %224 = vmatprep.mubr.f32.mxu0 %v70
    %225 = vmatmul.mubr.f32.gmra.mxu0 %v88
    %v226 = vpop.f32.mrf.mxu0
    %v227 = vadd.f32 0.0, %v226
    %v228 = vpop.f32.mrf.mxu0
    %229 = vmatprep.mubr.f32.mxu0 %v71
    %230 = vmatmul.mubr.f32.gmra.mxu0 %v82
    %v231 = vpop.f32.mrf.mxu0
    %v232 = vadd.f32 0.0, %v231
    %v233 = vpop.f32.mrf.mxu0
    %234 = vdwg.mxu0
    %235 = vmatprep.subr.mxu0 0.0
    %236 = vmatpush1.msra.mxu0 %v149
    %237 = vmatprep.subr.mxu0 0.0
    %238 = vmatpush1.msra.mxu0 %v148
    %239 = vmatprep.subr.mxu0 0.0
    %240 = vmatpush1.msra.mxu0 %v147
    %241 = vmatprep.subr.mxu0 0.0
    %242 = vmatpush1.msra.mxu0 %v146
    %243 = vmatprep.subr.mxu0 0.0
    %244 = vmatpush1.msra.mxu0 %v145
    %245 = vmatprep.subr.mxu0 0.0
    %246 = vmatpush1.msra.mxu0 %v144
    %247 = vmatprep.subr.mxu0 0.0
    %248 = vmatpush1.msra.mxu0 %v143
    %249 = vmatprep.subr.mxu0 0.0
    %250 = vmatpush1.msra.mxu0 %v142
    %251 = vmatprep.subr.mxu0 0.0
    %252 = vmatpush1.msra.mxu0 %v141
    %253 = vmatprep.subr.mxu0 0.0
    %254 = vmatpush1.msra.mxu0 %v140
    %255 = vmatprep.subr.mxu0 0.0
    %256 = vmatpush1.msra.mxu0 %v139
    %257 = vmatprep.subr.mxu0 0.0
    %258 = vmatpush1.msra.mxu0 %v138
    %259 = vmatprep.subr.mxu0 0.0
    %260 = vmatpush1.msra.mxu0 %v137
    %261 = vmatprep.subr.mxu0 0.0
    %262 = vmatpush1.msra.mxu0 %v136
    %263 = vmatprep.subr.mxu0 0.0
    %264 = vmatpush1.msra.mxu0 %v135
    %265 = vmatprep.subr.mxu0 0.0
    %266 = vmatpush1.msra.mxu0 %v134
    %267 = vmatprep.subr.mxu0 0.0
    %268 = vmatpush2.msra.mxu0 0.0
    %269 = vmatprep.subr.mxu0 0.0
    %270 = vmatpush2.msra.mxu0 0.0
    %271 = vmatprep.subr.mxu0 0.0
    %272 = vmatpush2.msra.mxu0 0.0
    %273 = vmatprep.subr.mxu0 0.0
    %274 = vmatpush2.msra.mxu0 0.0
    %275 = vmatprep.subr.mxu0 0.0
    %276 = vmatpush2.msra.mxu0 0.0
    %277 = vmatprep.subr.mxu0 0.0
    %278 = vmatpush2.msra.mxu0 0.0
    %279 = vmatprep.subr.mxu0 0.0
    %280 = vmatpush2.msra.mxu0 0.0
    %281 = vmatprep.subr.mxu0 0.0
    %282 = vmatpush2.msra.mxu0 0.0
    %283 = vmatprep.subr.mxu0 0.0
    %284 = vmatpush2.msra.mxu0 0.0
    %285 = vmatprep.subr.mxu0 0.0
    %286 = vmatpush2.msra.mxu0 0.0
    %287 = vmatprep.subr.mxu0 0.0
    %288 = vmatpush2.msra.mxu0 0.0
    %289 = vmatprep.subr.mxu0 0.0
    %290 = vmatpush2.msra.mxu0 0.0
    %291 = vmatprep.subr.mxu0 0.0
    %292 = vmatpush2.msra.mxu0 0.0
    %293 = vmatprep.subr.mxu0 0.0
    %294 = vmatpush2.msra.mxu0 0.0
    %295 = vmatprep.subr.mxu0 0.0
    %296 = vmatpush2.msra.mxu0 0.0
    %297 = vmatprep.subr.mxu0 0.0
    %298 = vmatpush2.msra.mxu0 0.0
    %299 = vmatprep.mubr.f32.mxu0 0.0
    %300 = vmatmul.mubr.f32.gmra.mxu0 %v92
    %v301 = vpop.f32.mrf.mxu0
    %v302 = vadd.f32 %v217, %v301
    %v303 = vpop.f32.mrf.mxu0
    %304 = vmatprep.mubr.f32.mxu0 0.0
    %305 = vmatmul.mubr.f32.gmra.mxu0 %v100
    %v306 = vpop.f32.mrf.mxu0
    %v307 = vadd.f32 %v222, %v306
    %v308 = vpop.f32.mrf.mxu0
    %309 = vmatprep.mubr.f32.mxu0 0.0
    %310 = vmatmul.mubr.f32.gmra.mxu0 %v95
    %v311 = vpop.f32.mrf.mxu0
    %v312 = vadd.f32 %v227, %v311
    %v313 = vpop.f32.mrf.mxu0
    %314 = vmatprep.mubr.f32.mxu0 0.0
    %315 = vmatmul.mubr.f32.gmra.mxu0 %v101
    %v316 = vpop.f32.mrf.mxu0
    %v317 = vadd.f32 %v232, %v316
    %v318 = vpop.f32.mrf.mxu0
    %319 = vdwg.mxu0
    %v320 = vld [vmem:[%s3] sm:$0x1]
    %v321 = vld [vmem:[%s4] sm:$0x1]
    %v322 = vadd.f32 %v302, %v307
    %v323 = vadd.f32 %v322, %v312
    %v324 = vadd.f32 %v323, %v317
    %v325 = vrot.slane %v324, 4
    %v326 = vadd.f32 %v324, %v325
    %v327 = vrot.slane %v326, 2
    %v328 = vadd.f32 %v326, %v327
    %v329 = vrot.slane %v328, 1
    %v330 = vadd.f32 %v328, %v329
    %331 = vrot.lane.b32.xlu0 %v330, 8
    %v332 = vpop.permute.xlu0 %331
    %v333 = vadd.f32 %v330, %v332
    %334 = vrot.lane.b32.xlu0 %v333, 16
    %v335 = vpop.permute.xlu0 %334
    %v336 = vadd.f32 %v333, %v335
    %337 = vrot.lane.b32.xlu0 %v336, 32
    %v338 = vpop.permute.xlu0 %337
    %v339 = vadd.f32 %v336, %v338
    %340 = vrot.lane.b32.xlu0 %v339, 64
    %v341 = vpop.permute.xlu0 %340
    %v342 = vadd.f32 %v339, %v341
    %v343 = vmul.f32 %v342, 0.001953125
    %v344 = vlaneseq
    %v345 = vshrl.u32 %v344, 7
    %v346 = vsub.s32 0, %v345
    %v347 = vrot.slane %v343, %v346
    %v348 = vsub.f32 %v302, %v347
    %v349 = vsub.f32 %v307, %v347
    %v350 = vsub.f32 %v312, %v347
    %v351 = vsub.f32 %v317, %v347
    %v352 = vmul.f32 %v348, %v348
    %v353 = vmul.f32 %v349, %v349
    %v354 = vmul.f32 %v350, %v350
    %v355 = vmul.f32 %v351, %v351
    %v356 = vadd.f32 %v352, %v353
    %v357 = vadd.f32 %v356, %v354
    %v358 = vadd.f32 %v357, %v355
    %v359 = vrot.slane %v358, 4
    %v360 = vadd.f32 %v358, %v359
    %v361 = vrot.slane %v360, 2
    %v362 = vadd.f32 %v360, %v361
    %v363 = vrot.slane %v362, 1
    %v364 = vadd.f32 %v362, %v363
    %365 = vrot.lane.b32.xlu0 %v364, 8
    %v366 = vpop.permute.xlu0 %365
    %v367 = vadd.f32 %v364, %v366
    %368 = vrot.lane.b32.xlu0 %v367, 16
    %v369 = vpop.permute.xlu0 %368
    %v370 = vadd.f32 %v367, %v369
    %371 = vrot.lane.b32.xlu0 %v370, 32
    %v372 = vpop.permute.xlu0 %371
    %v373 = vadd.f32 %v370, %v372
    %374 = vrot.lane.b32.xlu0 %v373, 64
    %v375 = vpop.permute.xlu0 %374
    %v376 = vadd.f32 %v373, %v375
    %v377 = vmul.f32 %v376, 0.001953125
    %v378 = vadd.f32 %v377, 1e-05
    %v379 = vrsqrt.pop %v378
    %v380 = vmul.f32 %v320, %v379
    %v382 = vlaneseq
    %v383 = vshrl.u32 %v382, 7
    %v384 = vsub.s32 0, %v383
    %v385 = vrot.slane %v380, %v384
    %v387 = vmul.f32 %v348, %v385
    %v388 = vmul.f32 %v349, %v385
    %v389 = vmul.f32 %v350, %v385
    %v390 = vmul.f32 %v351, %v385
    %v392 = vlaneseq
    %v393 = vshrl.u32 %v392, 7
    %v394 = vsub.s32 0, %v393
    %v395 = vrot.slane %v321, %v394
    %v397 = vadd.f32 %v387, %v395
    %v398 = vadd.f32 %v388, %v395
    %v399 = vadd.f32 %v389, %v395
    %v400 = vadd.f32 %v390, %v395
    %v401 = vmax.f32 %v397, 0.0
    %v402 = vmax.f32 %v398, 0.0
    %v403 = vmax.f32 %v399, 0.0
    %v404 = vmax.f32 %v400, 0.0
    %v409 = vrot.slane %v401, 7
    %v410 = vrot.slane %v402, 7
    %v411 = vsel %vm76, %v409, %v410
    %v412 = vrot.slane %v403, 7
    %v413 = vrot.slane %v404, 7
    %v414 = vsel %vm76, %v412, %v413
    %v419 = vsel %vm76, 0.0, %v409
    %v420 = vsel %vm76, 0.0, %v412
    %v421 = vrot.slane %v401, 1
    %v422 = vrot.slane %v402, 1
    %v423 = vsel %vm89, %v421, %v422
    %v424 = vrot.slane %v403, 1
    %v425 = vrot.slane %v404, 1
    %v426 = vsel %vm89, %v424, %v425
    %v431 = vsel %vm89, %v422, 0.0
    %v432 = vsel %vm89, %v425, 0.0
    %v433 = vld [vmem:[#allocation7] sm:$0xff]
    %v434 = vld [vmem:[#allocation7 + $0x8] sm:$0xff]
    %v435 = vld [vmem:[#allocation7 + $0x10] sm:$0xff]
    %v436 = vld [vmem:[#allocation7 + $0x18] sm:$0xff]
    %v437 = vld [vmem:[#allocation7 + $0x20] sm:$0xff]
    %v438 = vld [vmem:[#allocation7 + $0x28] sm:$0xff]
    %v439 = vld [vmem:[#allocation7 + $0x30] sm:$0xff]
    %v440 = vld [vmem:[#allocation7 + $0x38] sm:$0xff]
    %v441 = vld [vmem:[#allocation7 + $0x40] sm:$0xff]
    %v442 = vld [vmem:[#allocation7 + $0x48] sm:$0xff]
    %v443 = vld [vmem:[#allocation7 + $0x50] sm:$0xff]
    %v444 = vld [vmem:[#allocation7 + $0x58] sm:$0xff]
    %v445 = vld [vmem:[#allocation7 + $0x60] sm:$0xff]
    %v446 = vld [vmem:[#allocation7 + $0x68] sm:$0xff]
    %v447 = vld [vmem:[#allocation7 + $0x70] sm:$0xff]
    %v448 = vld [vmem:[#allocation7 + $0x78] sm:$0xff]
    %v449 = vld [vmem:[#allocation7 + $0x80] sm:$0xff]
    %v450 = vld [vmem:[#allocation7 + $0x88] sm:$0xff]
    %v451 = vld [vmem:[#allocation7 + $0x90] sm:$0xff]
    %v452 = vld [vmem:[#allocation7 + $0x98] sm:$0xff]
    %v453 = vld [vmem:[#allocation7 + $0xa0] sm:$0xff]
    %v454 = vld [vmem:[#allocation7 + $0xa8] sm:$0xff]
    %v455 = vld [vmem:[#allocation7 + $0xb0] sm:$0xff]
    %v456 = vld [vmem:[#allocation7 + $0xb8] sm:$0xff]
    %v457 = vld [vmem:[#allocation7 + $0xc0] sm:$0xff]
    %v458 = vld [vmem:[#allocation7 + $0xc8] sm:$0xff]
    %v459 = vld [vmem:[#allocation7 + $0xd0] sm:$0xff]
    %v460 = vld [vmem:[#allocation7 + $0xd8] sm:$0xff]
    %v461 = vld [vmem:[#allocation7 + $0xe0] sm:$0xff]
    %v462 = vld [vmem:[#allocation7 + $0xe8] sm:$0xff]
    %v463 = vld [vmem:[#allocation7 + $0xf0] sm:$0xff]
    %v464 = vld [vmem:[#allocation7 + $0xf8] sm:$0xff]
    %v465 = vld [vmem:[#allocation7 + $0x100] sm:$0xff]
    %v466 = vld [vmem:[#allocation7 + $0x108] sm:$0xff]
    %v467 = vld [vmem:[#allocation7 + $0x110] sm:$0xff]
    %v468 = vld [vmem:[#allocation7 + $0x118] sm:$0xff]
    %v469 = vld [vmem:[#allocation7 + $0x120] sm:$0xff]
    %v470 = vld [vmem:[#allocation7 + $0x128] sm:$0xff]
    %v471 = vld [vmem:[#allocation7 + $0x130] sm:$0xff]
    %v472 = vld [vmem:[#allocation7 + $0x138] sm:$0xff]
    %v473 = vld [vmem:[#allocation7 + $0x140] sm:$0xff]
    %v474 = vld [vmem:[#allocation7 + $0x148] sm:$0xff]
    %v475 = vld [vmem:[#allocation7 + $0x150] sm:$0xff]
    %v476 = vld [vmem:[#allocation7 + $0x158] sm:$0xff]
    %v477 = vld [vmem:[#allocation7 + $0x160] sm:$0xff]
    %v478 = vld [vmem:[#allocation7 + $0x168] sm:$0xff]
    %v479 = vld [vmem:[#allocation7 + $0x170] sm:$0xff]
    %v480 = vld [vmem:[#allocation7 + $0x178] sm:$0xff]
    %481 = vmatprep.subr.mxu0 0.0
    %482 = vmatpush1.msra.mxu0 %v448
    %483 = vmatprep.subr.mxu0 0.0
    %484 = vmatpush1.msra.mxu0 %v447
    %485 = vmatprep.subr.mxu0 0.0
    %486 = vmatpush1.msra.mxu0 %v446
    %487 = vmatprep.subr.mxu0 0.0
    %488 = vmatpush1.msra.mxu0 %v445
    %489 = vmatprep.subr.mxu0 0.0
    %490 = vmatpush1.msra.mxu0 %v444
    %491 = vmatprep.subr.mxu0 0.0
    %492 = vmatpush1.msra.mxu0 %v443
    %493 = vmatprep.subr.mxu0 0.0
    %494 = vmatpush1.msra.mxu0 %v442
    %495 = vmatprep.subr.mxu0 0.0
    %496 = vmatpush1.msra.mxu0 %v441
    %497 = vmatprep.subr.mxu0 0.0
    %498 = vmatpush1.msra.mxu0 %v440
    %499 = vmatprep.subr.mxu0 0.0
    %500 = vmatpush1.msra.mxu0 %v439
    %501 = vmatprep.subr.mxu0 0.0
    %502 = vmatpush1.msra.mxu0 %v438
    %503 = vmatprep.subr.mxu0 0.0
    %504 = vmatpush1.msra.mxu0 %v437
    %505 = vmatprep.subr.mxu0 0.0
    %506 = vmatpush1.msra.mxu0 %v436
    %507 = vmatprep.subr.mxu0 0.0
    %508 = vmatpush1.msra.mxu0 %v435
    %509 = vmatprep.subr.mxu0 0.0
    %510 = vmatpush1.msra.mxu0 %v434
    %511 = vmatprep.subr.mxu0 0.0
    %512 = vmatpush1.msra.mxu0 %v433
    %513 = vmatprep.subr.mxu0 0.0
    %514 = vmatpush2.msra.mxu0 %v464
    %515 = vmatprep.subr.mxu0 0.0
    %516 = vmatpush2.msra.mxu0 %v463
    %517 = vmatprep.subr.mxu0 0.0
    %518 = vmatpush2.msra.mxu0 %v462
    %519 = vmatprep.subr.mxu0 0.0
    %520 = vmatpush2.msra.mxu0 %v461
    %521 = vmatprep.subr.mxu0 0.0
    %522 = vmatpush2.msra.mxu0 %v460
    %523 = vmatprep.subr.mxu0 0.0
    %524 = vmatpush2.msra.mxu0 %v459
    %525 = vmatprep.subr.mxu0 0.0
    %526 = vmatpush2.msra.mxu0 %v458
    %527 = vmatprep.subr.mxu0 0.0
    %528 = vmatpush2.msra.mxu0 %v457
    %529 = vmatprep.subr.mxu0 0.0
    %530 = vmatpush2.msra.mxu0 %v456
    %531 = vmatprep.subr.mxu0 0.0
    %532 = vmatpush2.msra.mxu0 %v455
    %533 = vmatprep.subr.mxu0 0.0
    %534 = vmatpush2.msra.mxu0 %v454
    %535 = vmatprep.subr.mxu0 0.0
    %536 = vmatpush2.msra.mxu0 %v453
    %537 = vmatprep.subr.mxu0 0.0
    %538 = vmatpush2.msra.mxu0 %v452
    %539 = vmatprep.subr.mxu0 0.0
    %540 = vmatpush2.msra.mxu0 %v451
    %541 = vmatprep.subr.mxu0 0.0
    %542 = vmatpush2.msra.mxu0 %v450
    %543 = vmatprep.subr.mxu0 0.0
    %544 = vmatpush2.msra.mxu0 %v449
    %545 = vmatprep.mubr.f32.mxu0 %v401
    %546 = vmatmul.mubr.f32.gmra.mxu0 %v419
    %v547 = vpop.f32.mrf.mxu0
    %v548 = vadd.f32 0.0, %v547
    %v549 = vpop.f32.mrf.mxu0
    %550 = vmatprep.mubr.f32.mxu0 %v402
    %551 = vmatmul.mubr.f32.gmra.mxu0 %v411
    %v552 = vpop.f32.mrf.mxu0
    %v553 = vadd.f32 0.0, %v552
    %v554 = vpop.f32.mrf.mxu0
    %555 = vmatprep.mubr.f32.mxu0 %v403
    %556 = vmatmul.mubr.f32.gmra.mxu0 %v420
    %v557 = vpop.f32.mrf.mxu0
    %v558 = vadd.f32 0.0, %v557
    %v559 = vpop.f32.mrf.mxu0
    %560 = vmatprep.mubr.f32.mxu0 %v404
    %561 = vmatmul.mubr.f32.gmra.mxu0 %v414
    %v562 = vpop.f32.mrf.mxu0
    %v563 = vadd.f32 0.0, %v562
    %v564 = vpop.f32.mrf.mxu0
    %565 = vdwg.mxu0
    %566 = vmatprep.subr.mxu0 0.0
    %567 = vmatpush1.msra.mxu0 %v480
    %568 = vmatprep.subr.mxu0 0.0
    %569 = vmatpush1.msra.mxu0 %v479
    %570 = vmatprep.subr.mxu0 0.0
    %571 = vmatpush1.msra.mxu0 %v478
    %572 = vmatprep.subr.mxu0 0.0
    %573 = vmatpush1.msra.mxu0 %v477
    %574 = vmatprep.subr.mxu0 0.0
    %575 = vmatpush1.msra.mxu0 %v476
    %576 = vmatprep.subr.mxu0 0.0
    %577 = vmatpush1.msra.mxu0 %v475
    %578 = vmatprep.subr.mxu0 0.0
    %579 = vmatpush1.msra.mxu0 %v474
    %580 = vmatprep.subr.mxu0 0.0
    %581 = vmatpush1.msra.mxu0 %v473
    %582 = vmatprep.subr.mxu0 0.0
    %583 = vmatpush1.msra.mxu0 %v472
    %584 = vmatprep.subr.mxu0 0.0
    %585 = vmatpush1.msra.mxu0 %v471
    %586 = vmatprep.subr.mxu0 0.0
    %587 = vmatpush1.msra.mxu0 %v470
    %588 = vmatprep.subr.mxu0 0.0
    %589 = vmatpush1.msra.mxu0 %v469
    %590 = vmatprep.subr.mxu0 0.0
    %591 = vmatpush1.msra.mxu0 %v468
    %592 = vmatprep.subr.mxu0 0.0
    %593 = vmatpush1.msra.mxu0 %v467
    %594 = vmatprep.subr.mxu0 0.0
    %595 = vmatpush1.msra.mxu0 %v466
    %596 = vmatprep.subr.mxu0 0.0
    %597 = vmatpush1.msra.mxu0 %v465
    %598 = vmatprep.subr.mxu0 0.0
    %599 = vmatpush2.msra.mxu0 0.0
    %600 = vmatprep.subr.mxu0 0.0
    %601 = vmatpush2.msra.mxu0 0.0
    %602 = vmatprep.subr.mxu0 0.0
    %603 = vmatpush2.msra.mxu0 0.0
    %604 = vmatprep.subr.mxu0 0.0
    %605 = vmatpush2.msra.mxu0 0.0
    %606 = vmatprep.subr.mxu0 0.0
    %607 = vmatpush2.msra.mxu0 0.0
    %608 = vmatprep.subr.mxu0 0.0
    %609 = vmatpush2.msra.mxu0 0.0
    %610 = vmatprep.subr.mxu0 0.0
    %611 = vmatpush2.msra.mxu0 0.0
    %612 = vmatprep.subr.mxu0 0.0
    %613 = vmatpush2.msra.mxu0 0.0
    %614 = vmatprep.subr.mxu0 0.0
    %615 = vmatpush2.msra.mxu0 0.0
    %616 = vmatprep.subr.mxu0 0.0
    %617 = vmatpush2.msra.mxu0 0.0
    %618 = vmatprep.subr.mxu0 0.0
    %619 = vmatpush2.msra.mxu0 0.0
    %620 = vmatprep.subr.mxu0 0.0
    %621 = vmatpush2.msra.mxu0 0.0
    %622 = vmatprep.subr.mxu0 0.0
    %623 = vmatpush2.msra.mxu0 0.0
    %624 = vmatprep.subr.mxu0 0.0
    %625 = vmatpush2.msra.mxu0 0.0
    %626 = vmatprep.subr.mxu0 0.0
    %627 = vmatpush2.msra.mxu0 0.0
    %628 = vmatprep.subr.mxu0 0.0
    %629 = vmatpush2.msra.mxu0 0.0
    %630 = vmatprep.mubr.f32.mxu0 0.0
    %631 = vmatmul.mubr.f32.gmra.mxu0 %v423
    %v632 = vpop.f32.mrf.mxu0
    %v633 = vadd.f32 %v548, %v632
    %v634 = vpop.f32.mrf.mxu0
    %635 = vmatprep.mubr.f32.mxu0 0.0
    %636 = vmatmul.mubr.f32.gmra.mxu0 %v431
    %v637 = vpop.f32.mrf.mxu0
    %v638 = vadd.f32 %v553, %v637
    %v639 = vpop.f32.mrf.mxu0
    %640 = vmatprep.mubr.f32.mxu0 0.0
    %641 = vmatmul.mubr.f32.gmra.mxu0 %v426
    %v642 = vpop.f32.mrf.mxu0
    %v643 = vadd.f32 %v558, %v642
    %v644 = vpop.f32.mrf.mxu0
    %645 = vmatprep.mubr.f32.mxu0 0.0
    %646 = vmatmul.mubr.f32.gmra.mxu0 %v432
    %v647 = vpop.f32.mrf.mxu0
    %v648 = vadd.f32 %v563, %v647
    %v649 = vpop.f32.mrf.mxu0
    %650 = vdwg.mxu0
    %v651 = vld [vmem:[%s5] sm:$0x1]
    %v652 = vld [vmem:[%s6] sm:$0x1]
    %v653 = vadd.f32 %v633, %v638
    %v654 = vadd.f32 %v653, %v643
    %v655 = vadd.f32 %v654, %v648
    %v656 = vrot.slane %v655, 4
    %v657 = vadd.f32 %v655, %v656
    %v658 = vrot.slane %v657, 2
    %v659 = vadd.f32 %v657, %v658
    %v660 = vrot.slane %v659, 1
    %v661 = vadd.f32 %v659, %v660
    %662 = vrot.lane.b32.xlu0 %v661, 8
    %v663 = vpop.permute.xlu0 %662
    %v664 = vadd.f32 %v661, %v663
    %665 = vrot.lane.b32.xlu0 %v664, 16
    %v666 = vpop.permute.xlu0 %665
    %v667 = vadd.f32 %v664, %v666
    %668 = vrot.lane.b32.xlu0 %v667, 32
    %v669 = vpop.permute.xlu0 %668
    %v670 = vadd.f32 %v667, %v669
    %671 = vrot.lane.b32.xlu0 %v670, 64
    %v672 = vpop.permute.xlu0 %671
    %v673 = vadd.f32 %v670, %v672
    %v674 = vmul.f32 %v673, 0.001953125
    %v675 = vlaneseq
    %v676 = vshrl.u32 %v675, 7
    %v677 = vsub.s32 0, %v676
    %v678 = vrot.slane %v674, %v677
    %v679 = vsub.f32 %v633, %v678
    %v680 = vsub.f32 %v638, %v678
    %v681 = vsub.f32 %v643, %v678
    %v682 = vsub.f32 %v648, %v678
    %v683 = vmul.f32 %v679, %v679
    %v684 = vmul.f32 %v680, %v680
    %v685 = vmul.f32 %v681, %v681
    %v686 = vmul.f32 %v682, %v682
    %v687 = vadd.f32 %v683, %v684
    %v688 = vadd.f32 %v687, %v685
    %v689 = vadd.f32 %v688, %v686
    %v690 = vrot.slane %v689, 4
    %v691 = vadd.f32 %v689, %v690
    %v692 = vrot.slane %v691, 2
    %v693 = vadd.f32 %v691, %v692
    %v694 = vrot.slane %v693, 1
    %v695 = vadd.f32 %v693, %v694
    %696 = vrot.lane.b32.xlu0 %v695, 8
    %v697 = vpop.permute.xlu0 %696
    %v698 = vadd.f32 %v695, %v697
    %699 = vrot.lane.b32.xlu0 %v698, 16
    %v700 = vpop.permute.xlu0 %699
    %v701 = vadd.f32 %v698, %v700
    %702 = vrot.lane.b32.xlu0 %v701, 32
    %v703 = vpop.permute.xlu0 %702
    %v704 = vadd.f32 %v701, %v703
    %705 = vrot.lane.b32.xlu0 %v704, 64
    %v706 = vpop.permute.xlu0 %705
    %v707 = vadd.f32 %v704, %v706
    %v708 = vmul.f32 %v707, 0.001953125
    %v709 = vadd.f32 %v708, 1e-05
    %v710 = vrsqrt.pop %v709
    %v711 = vmul.f32 %v651, %v710
    %v713 = vlaneseq
    %v714 = vshrl.u32 %v713, 7
    %v715 = vsub.s32 0, %v714
    %v716 = vrot.slane %v711, %v715
    %v718 = vmul.f32 %v679, %v716
    %v719 = vmul.f32 %v680, %v716
    %v720 = vmul.f32 %v681, %v716
    %v721 = vmul.f32 %v682, %v716
    %v723 = vlaneseq
    %v724 = vshrl.u32 %v723, 7
    %v725 = vsub.s32 0, %v724
    %v726 = vrot.slane %v652, %v725
    %v728 = vadd.f32 %v718, %v726
    %v729 = vadd.f32 %v719, %v726
    %v730 = vadd.f32 %v720, %v726
    %v731 = vadd.f32 %v721, %v726
    %v732 = vadd.f32 %v728, %v68
    %v733 = vadd.f32 %v729, %v69
    %v734 = vadd.f32 %v730, %v70
    %v735 = vadd.f32 %v731, %v71
    %v736 = vmax.f32 %v732, 0.0
    %v737 = vmax.f32 %v733, 0.0
    %v738 = vmax.f32 %v734, 0.0
    %v739 = vmax.f32 %v735, 0.0
    %740 = vst [vmem:[#allocation8] sm:$0xff] %v736
    %741 = vst [vmem:[#allocation8 + $0x8] sm:$0xff] %v737
    %742 = vst [vmem:[#allocation8 + $0x10] sm:$0xff] %v738
    %743 = vst [vmem:[#allocation8 + $0x18] sm:$0xff] %v739
    // Predicated region
    $region42: #{tpu_custom_call.1} parent=1 // pred_check
      _
    $region43: #{tpu_custom_call.1} parent=1 // pred_check_branch
      %745 = sbr.rel (0) target = $region45
    $region44: #{tpu_custom_call.1} parent=1 // pred_region
      %s747 = ssub.s32 512, 512
      %748 = vsyncadd [#allocation4], %s747
      %s749 = sshll.u32 [#allocation8], 4
      %s750 = int_to_ptr.vmem [resolvable:$true] %s749
      %755 = dma.vmem_to_hbm [thread:$0]  %s750, 512, %s7, [#allocation4], 128, 128, 8
    $region45: #{tpu_custom_call.1} parent=1 // pred_fallthru
      _
    // Predicated region
    $region46: #{tpu_custom_call.1} parent=1 // pred_check
      _
    $region47: #{tpu_custom_call.1} parent=1 // pred_check_branch
      %757 = sbr.rel (0) target = $region49
    $region48: #{tpu_custom_call.1} parent=1 // pred_region
      %758 = dma.done [#allocation4], 512
    $region49: #{tpu_custom_call.1} parent=1 // pred_fallthru
      _
    %759 = vsyncpa [#allocation3], 1
    %760 = vsyncpa [#allocation6], 1
    %761 = vsyncpa [#allocation4], 1

</llo_original>
